<compile_context>
chip_gen: v7x
topology: tpu7x:2x2x1
jax: 0.10.0
libtpu: 0.0.40
codegen_flags: <defaults>
</compile_context>

<pallas_src>
import math
import functools

import jax
import jax.numpy as jnp
import numpy as np
from jax.experimental import pallas as pl
from jax.experimental.pallas import tpu as pltpu

_LANES = 128
_HALF_PI = math.pi / 2.0


# ---------------------------------------------------------------------------
# Kernels
# ---------------------------------------------------------------------------
def _packed_kernel(pat_ref, o_ref, *, seq_len, r_pack, pad_row, block_rows):
    """Lane-dense path: each output row packs `r_pack` embedding rows side by side.

    o_ref block: (block_rows, L) with L = r_pack * dim, a multiple of 128 lanes.
    pat_ref: (3, L) f32 host-precomputed per-lane patterns:
      row 0: inverse frequency of this lane's embedding column
      row 1: phase (0 for sin columns, pi/2 for cos columns; cos(x) = sin(x+pi/2))
      row 2: embedding-row offset of this lane within a packed row (as float)
    Exactly one transcendental (sin) per output element; stores are unmasked.
    """
    base = pl.program_id(0) * block_rows
    rows, lanes = o_ref.shape
    invf = pat_ref[0:1, :]
    phase = pat_ref[1:2, :]
    sub = pat_ref[2:3, :]

    packed_row = (jax.lax.broadcasted_iota(jnp.int32, (rows, lanes), 0)
                  + base).astype(jnp.float32)
    row = packed_row * float(r_pack) + sub        # global embedding row (exact in f32)
    angle = (row - float(seq_len)) * invf + phase
    val = jnp.sin(angle)
    val = jnp.where(row == float(pad_row), 0.0, val)   # zeroed padding_idx row
    o_ref[...] = val.astype(o_ref.dtype)


def _rowmajor_kernel(pat_ref, o_ref, *, seq_len, pad_row, block_rows):
    """Fallback path: output block (block_rows, dim); any dim (odd included).

    pat_ref: (2, dim) f32 host-precomputed rows [inv_freq | phase].  For odd dims
    the trailing zero column has inv_freq = phase = 0, so sin(0) = 0 falls out for
    free.  One transcendental per element; stores may be lane-masked if dim%128!=0.
    """
    base = pl.program_id(0) * block_rows
    rows, dim = o_ref.shape
    invf = pat_ref[0:1, :]
    phase = pat_ref[1:2, :]

    row = jax.lax.broadcasted_iota(jnp.int32, (rows, dim), 0) + base
    pos = (row - seq_len).astype(jnp.float32)
    angle = pos * invf + phase
    val = jnp.sin(angle)
    val = jnp.where(row == pad_row, 0.0, val)          # zeroed padding_idx row
    o_ref[...] = val.astype(o_ref.dtype)


# ---------------------------------------------------------------------------
# Module wrapper
# ---------------------------------------------------------------------------
class RelativeSinusoidalPositionalEmbeddingPallas:
    """JAX/Pallas counterpart of the PyTorch module.

    The sinusoidal table is analytic, so there is no stored weight buffer; only
    the `origin_shift` statefulness of the PyTorch regrowth path is mirrored.
    Results are cached per (seq_len, origin_shift) since they are input-independent.
    NOTE: the Python-level statefulness (origin_shift mutation + dict cache) is
    eager-only; do not jit/trace this wrapper directly.
    """

    def __init__(self, embedding_dim, padding_idx, init_size=1568, *,
                 dtype=jnp.float32, target_block_bytes=4 * 1024 * 1024):
        assert init_size % 2 == 0
        # half_dim - 1 is a divisor in the frequency formula (same flaw exists in
        # the fairseq/PyTorch original); guard it explicitly.
        assert embedding_dim >= 4, "embedding_dim must be >= 4"
        self.embedding_dim = embedding_dim
        self.padding_idx = padding_idx
        self.origin_shift = (init_size + 1) // 2 + 1
        self.dtype = dtype                     # bf16 halves HBM writeback if desired
        self.target_block_bytes = int(target_block_bytes)
        self._cache = {}

        half_dim = embedding_dim // 2
        neg_log_scale = -math.log(10000.0) / (half_dim - 1)

        # ---- lane-dense pattern (any even dim): L = lcm(dim, 128) lanes ----
        if embedding_dim % 2 == 0:
            g = math.gcd(embedding_dim, _LANES)
            self._r_pack = _LANES // g                   # embedding rows per slab row
            lane_w = embedding_dim * self._r_pack        # multiple of 128
            self._lane_width = lane_w
            lane = np.arange(lane_w)
            col = lane % embedding_dim
            sub = (lane // embedding_dim).astype(np.float32)
            k = np.where(col < half_dim, col, col - half_dim).astype(np.float32)
            invf = np.exp(k * neg_log_scale).astype(np.float32)
            phase = np.where(col < half_dim, 0.0, _HALF_PI).astype(np.float32)
            self._packed_pattern = jnp.asarray(np.stack([invf, phase, sub]))
        else:
            self._r_pack = None
            self._lane_width = None
            self._packed_pattern = None

        # ---- row-major fallback pattern: (2, dim) = [inv_freq | phase] ----
        col = np.arange(embedding_dim)
        k = np.where(col < half_dim, col, col - half_dim).astype(np.float32)
        invf_full = np.exp(k * neg_log_scale).astype(np.float32)
        phase_full = np.where(col < half_dim, 0.0, _HALF_PI).astype(np.float32)
        if embedding_dim % 2 == 1:
            invf_full[-1] = 0.0                          # trailing zero column:
            phase_full[-1] = 0.0                         # sin(0*pos + 0) == 0
        self._rowmajor_pattern = jnp.asarray(np.stack([invf_full, phase_full]))

    # -- public forward -------------------------------------------------------
    def __call__(self, input_ids):
        bsz, seq_len = input_ids.shape
        max_pos = self.padding_idx + seq_len
        if max_pos > self.origin_shift:
            # Mirrors the dynamic table regrowth of the PyTorch forward; only the
            # shift matters because the table is analytic.
            self.origin_shift = max_pos

        key = (seq_len, self.origin_shift)
        cached = self._cache.get(key)
        if cached is not None:
            return cached                     # steady state: no kernel launch at all

        out = self._build(seq_len, self.origin_shift)
        self._cache[key] = out
        return out

    # -- block sizing ----------------------------------------------------------
    def _pick_block_rows(self, n_total, row_bytes):
        """Row-block size: ~target_block_bytes per block, multiple of 8, and at
        least 2 grid steps for non-tiny tables (both v7x TensorCores get work;
        no-op on single-TC v5e/v6e)."""
        if n_total <= 8:
            return n_total
        by_budget = max(8, (self.target_block_bytes // max(row_bytes, 1)) // 8 * 8)
        half = -(-n_total // 2)               # cdiv(n_total, 2)
        half = -(-half // 8) * 8              # round up to sublane multiple
        block = max(8, min(by_budget, half))
        return min(block, n_total)

    # -- kernel launch ---------------------------------------------------------
    def _build(self, seq_len, origin_shift):
        dim = self.embedding_dim
        n_rows = 2 * seq_len
        # Output row that maps onto the zeroed padding_idx table row (may fall
        # outside [0, 2*seq_len), in which case nothing gets zeroed).
        pad_row = self.padding_idx - origin_shift + seq_len
        cparams = pltpu.CompilerParams(dimension_semantics=("parallel",))
        itemsize = np.dtype(self.dtype).itemsize

        # ---- lane-dense packed path (any even dim, packing constraint met) ----
        if self._packed_pattern is not None and n_rows % self._r_pack == 0:
            r_pack = self._r_pack
            lane_w = self._lane_width
            n_packed = n_rows // r_pack
            block_rows = self._pick_block_rows(n_packed, lane_w * itemsize)
            grid = (pl.cdiv(n_packed, block_rows),)
            kernel = functools.partial(
                _packed_kernel, seq_len=seq_len, r_pack=r_pack,
                pad_row=pad_row, block_rows=block_rows)
            out = pl.pallas_call(
                kernel,
                out_shape=jax.ShapeDtypeStruct((n_packed, lane_w), self.dtype),
                grid=grid,
                in_specs=[pl.BlockSpec((3, lane_w), lambda i: (0, 0))],
                out_specs=pl.BlockSpec((block_rows, lane_w), lambda i: (i, 0)),
                compiler_params=cparams,
            )(self._packed_pattern)
            if r_pack == 1:                   # lane_w == dim: already the right shape
                return out
            # Contiguous row-major reshape back to the module's layout.
            return out.reshape(n_rows, dim)

        # ---- row-major fallback (odd dim, or n_rows not divisible by r_pack) ----
        block_rows = self._pick_block_rows(n_rows, dim * itemsize)
        grid = (pl.cdiv(n_rows, block_rows),)
        kernel = functools.partial(
            _rowmajor_kernel, seq_len=seq_len, pad_row=pad_row,
            block_rows=block_rows)
        return pl.pallas_call(
            kernel,
            out_shape=jax.ShapeDtypeStruct((n_rows, dim), self.dtype),
            grid=grid,
            in_specs=[pl.BlockSpec((2, dim), lambda i: (0, 0))],
            out_specs=pl.BlockSpec((block_rows, dim), lambda i: (i, 0)),
            compiler_params=cparams,
        )(self._rowmajor_pattern)


# ---------------------------------------------------------------------------
# Pure numpy reference (mirrors the PyTorch forward), for verification.
# ---------------------------------------------------------------------------
def _reference_forward(input_ids, embedding_dim, padding_idx, init_size=1568):
    bsz, seq_len = input_ids.shape
    origin_shift = (init_size + 1) // 2 + 1
    max_pos = padding_idx + seq_len
    if max_pos > origin_shift:
        num_embeddings = max_pos * 2
        origin_shift = num_embeddings // 2
    else:
        num_embeddings = init_size + 1

    half_dim = embedding_dim // 2
    scale = math.log(10000.0) / (half_dim - 1)
    inv_freq = np.exp(np.arange(half_dim, dtype=np.float32) * -scale)
    lo = (-num_embeddings) // 2
    hi = num_embeddings // 2
    pos_all = np.arange(lo, hi, dtype=np.float32)
    ang = pos_all[:, None] * inv_freq[None, :]
    weights = np.concatenate([np.sin(ang), np.cos(ang)], axis=1).reshape(
        num_embeddings, -1)
    if embedding_dim % 2 == 1:
        weights = np.concatenate(
            [weights, np.zeros((num_embeddings, 1), np.float32)], axis=1)
    weights[padding_idx, :] = 0.0
    positions = np.arange(-seq_len, seq_len) + origin_shift
    return weights[positions]


if __name__ == "__main__":
    key = jax.random.PRNGKey(0)

    # (name, embedding_dim, padding_idx, init_size, bsz, seq_len, ctor_kwargs, tol)
    configs = [
        ("packed_d32",      32, 0, 1568, 2,  8, {},                                  1e-4),
        ("packed_d160",    160, 0, 1568, 2,  8, {},                                  1e-4),
        ("packed_d256",    256, 0, 1568, 2, 64, {"target_block_bytes": 32 * 256 * 4}, 1e-4),
        ("rowmajor_d160",  160, 0, 1568, 2,  9, {},                                  1e-4),
        ("odd_d33_regrow",  33, 4,   16, 2,  6, {},                                  1e-4),
        ("partial_block",   32, 0, 1568, 2, 20, {"target_block_bytes": 4096},        1e-4),
        ("bf16_d128",      128, 0, 1568, 2, 16, {"dtype": jnp.bfloat16},             1e-2),
    ]

    for name, dim, pad_idx, init_size, bsz, seq_len, kwargs, tol in configs:
        key, sub = jax.random.split(key)
        # Forward only uses the shape of `input`; values are dummy token ids.
        input_ids = jax.random.randint(sub, (bsz, seq_len), 0, 100, dtype=jnp.int32)

        module = RelativeSinusoidalPositionalEmbeddingPallas(
            dim, pad_idx, init_size, **kwargs)
        out = module(input_ids)
        out = jax.block_until_ready(out)

        # Second call with the same shape hits the cache (no kernel launch).
        out_cached = module(input_ids)
        assert out_cached is out, name

        exp_dtype = kwargs.get("dtype", jnp.float32)
        ref = _reference_forward(np.asarray(input_ids), dim, pad_idx, init_size)
        assert out.shape == (2 * seq_len, dim), (name, out.shape)
        assert out.dtype == exp_dtype, (name, out.dtype)
        np.testing.assert_allclose(np.asarray(out).astype(np.float32), ref,
                                   rtol=tol, atol=tol, err_msg=name)

    print("KERNEL_OK")
</pallas_src>

<mosaic_0001>
module attributes {stable_mosaic.version = 11 : i64} {
  func.func @_packed_kernel(%arg0: i32, %arg1: memref<3x128xf32, #tpu.memory_space<vmem>>, %arg2: memref<4x128xf32, #tpu.memory_space<vmem>>) attributes {dimension_semantics = [#tpu.dimension_semantics<parallel>], iteration_bounds = array<i64: 1>, scalar_prefetch = 0 : i64, scratch_operands = 0 : i64, tpu.core_type = #tpu.core_type<tc>, window_params = [{pipeline_mode = #tpu.pipeline_mode<synchronous>, transform_indices = @transform_0, window_bounds = array<i64: 3, 128>}, {transform_indices = @transform_1, window_bounds = array<i64: 4, 128>}]} {
    %c4_i32 = arith.constant 4 : i32
    %0 = arith.muli %arg0, %c4_i32 : i32
    %c0 = arith.constant 0 : index
    %c0_0 = arith.constant 0 : index
    %1 = vector.load %arg1[%c0, %c0_0] : memref<3x128xf32, #tpu.memory_space<vmem>>, vector<1x128xf32>
    %c1 = arith.constant 1 : index
    %c0_1 = arith.constant 0 : index
    %2 = vector.load %arg1[%c1, %c0_1] : memref<3x128xf32, #tpu.memory_space<vmem>>, vector<1x128xf32>
    %c2 = arith.constant 2 : index
    %c0_2 = arith.constant 0 : index
    %3 = vector.load %arg1[%c2, %c0_2] : memref<3x128xf32, #tpu.memory_space<vmem>>, vector<1x128xf32>
    %4 = tpu.iota {dimensions = array<i32: 0>} : vector<4x128xi32>
    %5 = vector.broadcast %0 : i32 to vector<4x128xi32>
    %6 = arith.addi %4, %5 : vector<4x128xi32>
    %7 = arith.sitofp %6 : vector<4x128xi32> to vector<4x128xf32>
    %cst = arith.constant 4.000000e+00 : f32
    %8 = vector.broadcast %cst : f32 to vector<4x128xf32>
    %9 = arith.mulf %7, %8 : vector<4x128xf32>
    %10 = vector.broadcast %3 : vector<1x128xf32> to vector<4x128xf32>
    %11 = arith.addf %9, %10 : vector<4x128xf32>
    %cst_3 = arith.constant 8.000000e+00 : f32
    %12 = vector.broadcast %cst_3 : f32 to vector<4x128xf32>
    %13 = arith.subf %11, %12 : vector<4x128xf32>
    %14 = vector.broadcast %1 : vector<1x128xf32> to vector<4x128xf32>
    %15 = arith.mulf %13, %14 : vector<4x128xf32>
    %16 = vector.broadcast %2 : vector<1x128xf32> to vector<4x128xf32>
    %17 = arith.addf %15, %16 : vector<4x128xf32>
    %18 = math.sin %17 : vector<4x128xf32>
    %cst_4 = arith.constant -7.770000e+02 : f32
    %19 = vector.broadcast %cst_4 : f32 to vector<4x128xf32>
    %20 = arith.cmpf oeq, %11, %19 : vector<4x128xf32>
    %cst_5 = arith.constant 0.000000e+00 : f32
    %21 = vector.broadcast %cst_5 : f32 to vector<4x128xf32>
    %22 = arith.select %20, %21, %18 : vector<4x128xi1>, vector<4x128xf32>
    %c0_6 = arith.constant 0 : index
    %c0_7 = arith.constant 0 : index
    %23 = vector.load %arg2[%c0_6, %c0_7] : memref<4x128xf32, #tpu.memory_space<vmem>>, vector<4x128xf32>
    tpu.vector_store %arg2[%c0_6, %c0_7], %22 {strides = array<i32>} : memref<4x128xf32, #tpu.memory_space<vmem>>, vector<4x128xf32>,
    return
  }
  func.func @transform_0(%arg0: i32) -> (i32, i32) {
    %c0_i32 = arith.constant 0 : i32
    %c0_i32_0 = arith.constant 0 : i32
    %c0_i32_1 = arith.constant 0 : i32
    return %c0_i32, %c0_i32_0 : i32, i32
  }
  func.func @transform_1(%arg0: i32) -> (i32, i32) {
    %c0_i32 = arith.constant 0 : i32
    %c0_i32_0 = arith.constant 0 : i32
    return %arg0, %c0_i32 : i32, i32
  }
}

</mosaic_0001>

<llo_original>
// kernel: tpu_custom_call.1
$region0: #{tpu_custom_call.1}
  #allocation0 [shape = 'u32[]', space=smem, size = 0x4, offset = 0x4, fixed_abs, tag = 'smem constant byte address 0x4 - core index']
  #allocation1 [shape = 'u32[144,128]{1,0:T(1,128)}', space=vmem, size = 0x12000, scoped, tag = 'internal scratch']
  %s0 = inlined_call_operand.hbm [shape: f32[3,128], index: 0, kind: input, shape index: {}]
  %s1 = inlined_call_operand.hbm [shape: f32[4,128], index: 1, kind: output, shape index: {}]
  %s2 = sld [smem:[#allocation0]]
  $region18: #{tpu_custom_call.1} parent=0
    _
  %s4 = ssub.s32 1, %s2
  %s5 = scalar_select 0, %s4, %s2
  $region1: #{tpu_custom_call.1} parent=0
    #allocation2 [shape = 'u8[2048]{0}', space=vmem, size = 0x800, scoped, tag = 'input window, operand 0, single buffered']
    #allocation3 [shape = 's32[1]{0}', space=sflag, size = 0x4, scoped, tag = 'scoped memory for tpu_custom_call.1']
    #allocation4 [shape = 's32[1]{0}', space=sflag, size = 0x4, scoped, tag = 'scoped memory for tpu_custom_call.1']
    #allocation5 [shape = 'u8[2048]{0}', space=vmem, size = 0x800, scoped, tag = 'output window, operand 0, single buffered']
    %6 = vsyncpa [#allocation3], 0
    %7 = vsyncpa [#allocation4], 0
    // Predicated region
    $region2: #{tpu_custom_call.1} parent=1 // pred_check
      _
    $region3: #{tpu_custom_call.1} parent=1 // pred_check_branch
      %9 = sbr.rel (0) target = $region5
    $region4: #{tpu_custom_call.1} parent=1 // pred_region
      %s11 = ssub.s32 64, 64
      %12 = vsyncadd [#allocation3], %s11
      %s14 = sshll.u32 [#allocation2], 4
      %s15 = int_to_ptr.vmem [resolvable:$true] %s14
      %17 = dma.hbm_to_vmem [thread:$0]  %s0, 64, %s15, [#allocation3]
    $region5: #{tpu_custom_call.1} parent=1 // pred_fallthru
      _
    // Predicated region
    $region6: #{tpu_custom_call.1} parent=1 // pred_check
      _
    $region7: #{tpu_custom_call.1} parent=1 // pred_check_branch
      %19 = sbr.rel (0) target = $region9
    $region8: #{tpu_custom_call.1} parent=1 // pred_region
      %20 = dma.done [#allocation3], 64
    $region9: #{tpu_custom_call.1} parent=1 // pred_fallthru
      _
    %s21 = smul.u32 0, 4
    %v22 = vld [vmem:[#allocation2] sm:$0x1]
    %v23 = vld [vmem:[#allocation2 + $0x1] sm:$0x1]
    %v24 = vld [vmem:[#allocation2 + $0x2] sm:$0x1]
    %v25 = vlaneseq
    %v26 = vshrl.u32 %v25, 7
    %v27 = vstv %s21
    %v28 = vadd.s32 %v26, %v27
    %v29 = vcvt.s32.f32 %v28
    %v30 = vmul.f32 %v29, 4.0
    %v31 = vlaneseq
    %v32 = vshrl.u32 %v31, 7
    %v33 = vsub.s32 0, %v32
    %v34 = vrot.slane %v24, %v33
    %v35 = vadd.f32 %v30, %v34
    %v36 = vsub.f32 %v35, 8.0
    %v37 = vlaneseq
    %v38 = vshrl.u32 %v37, 7
    %v39 = vsub.s32 0, %v38
    %v40 = vrot.slane %v22, %v39
    %v41 = vmul.f32 %v36, %v40
    %v42 = vlaneseq
    %v43 = vshrl.u32 %v42, 7
    %v44 = vsub.s32 0, %v43
    %v45 = vrot.slane %v23, %v44
    %v46 = vadd.f32 %v41, %v45
    %v47 = vand.u32 2147483647, %v46
    %vm48 = vcmp.le.f32.partialorder %v47, 0.7853982
    %vm49 = vcmp.lt.s32.totalorder %v46, 0
    %v50 = vand.u32 %v46, 2139095040
    %v51 = vshrl.u32 %v50, 23
    %v52 = vsub.s32 %v51, 127
    %v53 = vand.u32 2147483647, %v46
    %v54 = vand.u32 %v53, 8388607
    %v55 = vor.u32 %v54, 8388608
    %v56 = vsub.s32 0, %v55
    %v57 = vadd.s32 %v52, 1
    %vm58 = vcmp.gt.s32.totalorder %v57, 0
    %v59 = vsel %vm58, %v57, 0
    %v60 = vshrl.u32 %v59, 5
    %v61 = vand.u32 %v59, 31
    %v62 = vsub.s32 32, %v61
    %v63 = vshrl.u32 683565275, %v62
    %v64 = vshll.u32 683565275, %v61
    %v65 = vshrl.u32 2475754826, %v62
    %v66 = vor.u32 %v64, %v65
    %v67 = vshll.u32 2475754826, %v61
    %v68 = vshrl.u32 2131351028, %v62
    %v69 = vor.u32 %v67, %v68
    %v70 = vshll.u32 2131351028, %v61
    %v71 = vshrl.u32 2102212464, %v62
    %v72 = vor.u32 %v70, %v71
    %v73 = vshll.u32 2102212464, %v61
    %v74 = vshrl.u32 920167782, %v62
    %v75 = vor.u32 %v73, %v74
    %v76 = vshll.u32 920167782, %v61
    %v77 = vshrl.u32 1326507024, %v62
    %v78 = vor.u32 %v76, %v77
    %vm79 = vcmp.lt.s32.totalorder %v60, 1
    %vm80 = vcmp.lt.s32.totalorder %v60, 2
    %vm81 = vcmp.lt.s32.totalorder %v60, 3
    %vm82 = vcmp.lt.s32.totalorder %v60, 4
    %v83 = vsel %vm79, %v63, %v66
    %v84 = vsel %vm82, %v72, 2102212464
    %v85 = vsel %vm81, %v69, %v84
    %v86 = vsel %vm80, %v83, %v85
    %v87 = vsel %vm79, %v66, %v69
    %v88 = vsel %vm82, %v75, 920167782
    %v89 = vsel %vm81, %v72, %v88
    %v90 = vsel %vm80, %v87, %v89
    %v91 = vsel %vm79, %v69, %v72
    %v92 = vsel %vm82, %v78, 1326507024
    %v93 = vsel %vm81, %v75, %v92
    %v94 = vsel %vm80, %v91, %v93
    %v95 = vshll.u32 %v55, 8
    %v96 = vmul.u32.u64.compose %v95, %v94
    %v97 = vextract.low.u32 %v96
    %v98 = vextract.high.u32 %v96
    %v99 = vmul.u32.u64.compose %v95, %v90
    %v100 = vextract.low.u32 %v99
    %v101 = vextract.high.u32 %v99
    %v102 = vmul.u32 %v95, %v86
    %v103 = vadd.s32 %v98, %v100
    %vm104 = vc.u32 %v98, %v100
    %v105 = vadd.s32 %v101, 1
    %v106 = vsel %vm104, %v105, %v101
    %v107 = vadd.s32 %v102, %v106
    %v108 = vadd.s32 %v107, 536870912
    %v109 = vshrl.u32 %v108, 30
    %v110 = vshll.u32 %v109, 30
    %v111 = vsub.s32 %v107, %v110
    %vm112 = vcmp.lt.s32.totalorder %v111, 0
    %v113 = vsub.s32 0, %v111
    %v114 = vsel %vm112, %v113, %v111
    %v115 = vclz %v114
    %v116 = vsub.s32 %v115, 2
    %vm117 = vcmp.gt.s32.totalorder 0, %v116
    %v118 = vsel %vm117, 0, %v116
    %v119 = vsub.s32 32, %v118
    %v120 = vshll.u32 %v111, %v118
    %v121 = vshrl.u32 %v103, %v119
    %v122 = vor.u32 %v120, %v121
    %v123 = vsub.s32 4294967266, %v118
    %v124 = vadd.s32 %v123, 127
    %v125 = vshll.u32 %v124, 23
    %v126 = vor.u32 4788187, %v125
    %v127 = vand.u32 2147483647, %v126
    %v129 = vcvt.s32.f32 %v122
    %v130 = vmul.f32 %v129, %v127
    %v131 = vxor.u32 %v130, 2147483648
    %v132 = vsel %vm49, %v131, %v130
    %v133 = vsub.s32 4, %v109
    %v134 = vsel %vm49, %v133, %v109
    %v135 = vsel %vm48, %v46, %v132
    %v136 = vsel %vm48, 0, %v134
    %v137 = vcosq.f32.pop %v135
    %v138 = vsinq.f32.pop %v135
    %vm139 = vweird.f32 %v46
    %v140 = vadd.s32 %v136, 3
    %v141 = vand.u32 %v140, 3
    %vm142 = vcmp.lt.s32.totalorder %v141, 2
    %vm143 = vcmp.eq.s32.totalorder %v141, 0
    %v144 = vxor.u32 %v138, 2147483648
    %v145 = vsel %vm143, %v137, %v144
    %vm146 = vcmp.eq.s32.totalorder %v141, 2
    %v147 = vxor.u32 %v137, 2147483648
    %v148 = vsel %vm146, %v147, %v138
    %v149 = vsel %vm142, %v145, %v148
    %v150 = vsel %vm139, nan, %v149
    %vm151 = vcmp.eq.f32.partialorder %v35, -777.0
    %v152 = vsel %vm151, 0.0, %v150
    %153 = vst [vmem:[#allocation5] sm:$0xf] %v152
    // Predicated region
    $region10: #{tpu_custom_call.1} parent=1 // pred_check
      _
    $region11: #{tpu_custom_call.1} parent=1 // pred_check_branch
      %155 = sbr.rel (0) target = $region13
    $region12: #{tpu_custom_call.1} parent=1 // pred_region
      %s157 = ssub.s32 64, 64
      %158 = vsyncadd [#allocation4], %s157
      %s160 = sshll.u32 [#allocation5], 4
      %s161 = int_to_ptr.vmem [resolvable:$true] %s160
      %163 = dma.vmem_to_hbm [thread:$0]  %s161, 64, %s1, [#allocation4]
    $region13: #{tpu_custom_call.1} parent=1 // pred_fallthru
      _
    // Predicated region
    $region14: #{tpu_custom_call.1} parent=1 // pred_check
      _
    $region15: #{tpu_custom_call.1} parent=1 // pred_check_branch
      %165 = sbr.rel (0) target = $region17
    $region16: #{tpu_custom_call.1} parent=1 // pred_region
      %166 = dma.done [#allocation4], 64
    $region17: #{tpu_custom_call.1} parent=1 // pred_fallthru
      _
    %167 = vsyncpa [#allocation3], 1
    %168 = vsyncpa [#allocation4], 1

</llo_original>
